<compile_context>
chip_gen: v7x
topology: tpu7x:2x2x1
jax: 0.10.0
libtpu: 0.0.40
codegen_flags: <defaults>
</compile_context>

<pallas_src>
import functools

import jax
import jax.numpy as jnp
from jax.experimental import pallas as pl
from jax.experimental.pallas import tpu as pltpu

BN_EPS = 1e-5
TILE_M_MAX = 512          # rows per grid step (multiple of 8)
TILE_CO_MAX = 512         # output-channel tile (multiple of 128 when tiling)
VMEM_LIMIT = 64 * 1024 * 1024


# ----------------------------- Pallas kernels ------------------------------

def _matmul_bias_kernel(x_ref, w_ref, bias_ref, o_ref, *, relu):
    # out = [relu](x @ w + bias)   (BN scale pre-folded into w)
    acc = jnp.dot(x_ref[...], w_ref[...], preferred_element_type=jnp.float32)
    out = acc + bias_ref[...]
    if relu:
        out = jnp.maximum(out, 0.0)
    o_ref[...] = out.astype(o_ref.dtype)


def _matmul_bias_add_relu_kernel(x_ref, w_ref, bias_ref, sc_ref, o_ref):
    # out = relu(x @ w + bias + shortcut)
    acc = jnp.dot(x_ref[...], w_ref[...], preferred_element_type=jnp.float32)
    out = acc + bias_ref[...] + sc_ref[...].astype(jnp.float32)
    o_ref[...] = jnp.maximum(out, 0.0).astype(o_ref.dtype)


# ----------------------------- wrappers -------------------------------------

def _tile_rows(m):
    # Full extent is always a legal block; otherwise 512 (mult. of 8), last
    # partial block is masked by Pallas.
    return m if m <= TILE_M_MAX else TILE_M_MAX


def _tile_cols(co):
    # Full extent, or 512 (multiple of 128) with masked last block.
    return co if co <= TILE_CO_MAX else TILE_CO_MAX


def fused_matmul_bias(x, w, bias, *, relu, shortcut=None, out_dtype=jnp.float32):
    """out = [relu](x @ w + bias [+ shortcut]).

    x: (M, K) bf16, w: (K, Co) bf16 (BN scale folded in), bias: (1, Co) f32,
    shortcut: optional (M, Co) f32.  f32 accumulation on the MXU.
    """
    M, K = x.shape
    Co = w.shape[1]
    tm = _tile_rows(M)
    tc = _tile_cols(Co)
    grid = (pl.cdiv(Co, tc), pl.cdiv(M, tm))   # Co outer => weight block resident

    in_specs = [
        pl.BlockSpec((tm, K), lambda j, i: (i, 0)),
        pl.BlockSpec((K, tc), lambda j, i: (0, j)),
        pl.BlockSpec((1, tc), lambda j, i: (0, j)),
    ]
    args = [x, w, bias]
    if shortcut is None:
        kernel = functools.partial(_matmul_bias_kernel, relu=relu)
    else:
        kernel = _matmul_bias_add_relu_kernel
        in_specs.append(pl.BlockSpec((tm, tc), lambda j, i: (i, j)))
        args.append(shortcut)

    return pl.pallas_call(
        kernel,
        out_shape=jax.ShapeDtypeStruct((M, Co), out_dtype),
        grid=grid,
        in_specs=in_specs,
        out_specs=pl.BlockSpec((tm, tc), lambda j, i: (i, j)),
        compiler_params=pltpu.CompilerParams(
            dimension_semantics=("parallel", "parallel"),
            vmem_limit_bytes=VMEM_LIMIT,
        ),
    )(*args)


# ----------------------------- glue (im2col etc.) ---------------------------

def im2col_nhwc(x, ksize, stride, pad):
    """x: (N,H,W,C) -> ((N*Ho*Wo, k*k*C) bf16, Ho, Wo); K = (kh,kw)-outer, C-inner."""
    N, H, W, C = x.shape
    xp = jnp.pad(x, ((0, 0), (pad, pad), (pad, pad), (0, 0)))
    Ho = (H + 2 * pad - ksize) // stride + 1
    Wo = (W + 2 * pad - ksize) // stride + 1
    cols = []
    for kh in range(ksize):
        for kw in range(ksize):
            cols.append(xp[:, kh:kh + stride * Ho:stride,
                           kw:kw + stride * Wo:stride, :])   # (N,Ho,Wo,C)
    col = jnp.stack(cols, axis=3)                            # (N,Ho,Wo,k*k,C)
    col = col.reshape(N * Ho * Wo, ksize * ksize * C)
    return col.astype(jnp.bfloat16), Ho, Wo


def miyato_normalize(w, iters=5):
    """Spectral-normalize a conv weight (Cout, Cin, kh, kw) -> w / sigma."""
    wm = w.reshape(w.shape[0], -1)
    u = jnp.ones((wm.shape[0],), jnp.float32) / jnp.sqrt(wm.shape[0])
    v = None
    for _ in range(iters):
        v = wm.T @ u
        v = v / (jnp.linalg.norm(v) + 1e-12)
        u = wm @ v
        u = u / (jnp.linalg.norm(u) + 1e-12)
    sigma = u @ (wm @ v)
    return w / sigma


def fold_bn(gamma, beta, mean, var):
    scale = gamma / jnp.sqrt(var + BN_EPS)
    bias = beta - mean * scale
    return scale.reshape(1, -1), bias.reshape(1, -1)


def conv_weight_to_col(w_oihw, scale):
    """(Cout,Cin,kh,kw) f32 -> (kh*kw*Cin, Cout) bf16 with BN scale folded in."""
    w_col = jnp.transpose(w_oihw, (2, 3, 1, 0)).reshape(-1, w_oihw.shape[0])
    return (w_col * scale).astype(jnp.bfloat16)


def init_basic_block(key, in_planes, planes, stride):
    ks = jax.random.split(key, 6)
    p = {}
    w1 = miyato_normalize(
        0.2 * jax.random.normal(ks[0], (planes, in_planes, 3, 3), jnp.float32))
    w2 = miyato_normalize(
        0.2 * jax.random.normal(ks[1], (planes, planes, 3, 3), jnp.float32))
    p["w1_oihw"], p["w2_oihw"] = w1, w2

    def bn_params(k):
        k1, k2, k3, k4 = jax.random.split(k, 4)
        gamma = 1.0 + 0.1 * jax.random.normal(k1, (planes,), jnp.float32)
        beta = 0.1 * jax.random.normal(k2, (planes,), jnp.float32)
        mean = 0.1 * jax.random.normal(k3, (planes,), jnp.float32)
        var = 1.0 + 0.1 * jax.random.uniform(k4, (planes,), jnp.float32)
        return gamma, beta, mean, var

    p["bn1"], p["bn2"] = bn_params(ks[2]), bn_params(ks[3])
    s1, p["b1"] = fold_bn(*p["bn1"])
    s2, p["b2"] = fold_bn(*p["bn2"])
    p["w1"] = conv_weight_to_col(w1, s1)     # BN1 scale folded, bf16
    p["w2"] = conv_weight_to_col(w2, s2)     # BN2 scale folded, bf16

    if stride != 1 or in_planes != planes:
        ws = miyato_normalize(
            0.2 * jax.random.normal(ks[4], (planes, in_planes, 1, 1), jnp.float32))
        p["ws_oihw"] = ws
        p["bns"] = bn_params(ks[5])
        ss, p["bs"] = fold_bn(*p["bns"])
        p["ws"] = conv_weight_to_col(ws, ss)
    return p


def basic_block_forward(x, params, stride):
    """x: (N, Cin, H, W) float32 -> (N, planes, Ho, Wo) float32."""
    N, Cin, H, W = x.shape
    planes = params["w1"].shape[1]
    x_nhwc = jnp.transpose(x, (0, 2, 3, 1))          # single layout change in

    # conv1 (3x3, stride, pad 1) + bn1 + relu  — fused bf16 matmul, bf16 out
    col1, Ho, Wo = im2col_nhwc(x_nhwc, 3, stride, 1)
    out1 = fused_matmul_bias(col1, params["w1"], params["b1"], relu=True,
                             out_dtype=jnp.bfloat16)
    out1_nhwc = out1.reshape(N, Ho, Wo, planes)      # pure reshape, no transpose

    # shortcut branch (f32 output for the residual epilogue)
    if stride != 1 or Cin != planes:
        xs = x_nhwc[:, ::stride, ::stride, :]        # 1x1 conv w/ stride, pad 0
        sc = fused_matmul_bias(xs.reshape(-1, Cin).astype(jnp.bfloat16),
                               params["ws"], params["bs"], relu=False)
    else:
        sc = x_nhwc.reshape(-1, Cin)

    # conv2 (3x3, stride 1, pad 1) + bn2 + residual add + relu  — fused
    col2, Ho2, Wo2 = im2col_nhwc(out1_nhwc, 3, 1, 1)
    out2 = fused_matmul_bias(col2, params["w2"], params["b2"], relu=True,
                             shortcut=sc)
    return jnp.transpose(out2.reshape(N, Ho2, Wo2, planes), (0, 3, 1, 2))


# ----------------------------- pure-JAX reference ---------------------------

def _ref_conv(x, w, stride, pad):
    return jax.lax.conv_general_dilated(
        x, w, (stride, stride), [(pad, pad), (pad, pad)],
        dimension_numbers=("NCHW", "OIHW", "NCHW"))


def _ref_bn(x, bn):
    gamma, beta, mean, var = bn
    inv = gamma / jnp.sqrt(var + BN_EPS)
    return x * inv[None, :, None, None] + (beta - mean * inv)[None, :, None, None]


def ref_forward(x, p, stride):
    out = jax.nn.relu(_ref_bn(_ref_conv(x, p["w1_oihw"], stride, 1), p["bn1"]))
    out = _ref_bn(_ref_conv(out, p["w2_oihw"], 1, 1), p["bn2"])
    if stride != 1 or x.shape[1] != p["w1_oihw"].shape[0]:
        sc = _ref_bn(_ref_conv(x, p["ws_oihw"], stride, 0), p["bns"])
    else:
        sc = x
    return jax.nn.relu(out + sc)


# ----------------------------- main ------------------------------------------

if __name__ == "__main__":
    key = jax.random.PRNGKey(0)
    kx, kp = jax.random.split(key)

    N, in_planes, planes, H, W, stride = 2, 4, 8, 16, 16, 2
    x = jax.random.normal(kx, (N, in_planes, H, W), jnp.float32)
    params = init_basic_block(kp, in_planes, planes, stride)

    out = jax.block_until_ready(basic_block_forward(x, params, stride))
    ref = jax.block_until_ready(ref_forward(x, params, stride))

    assert out.shape == ref.shape == (N, planes, H // stride, W // stride), out.shape
    max_err = float(jnp.max(jnp.abs(out - ref)))
    # bf16 operands vs f32 reference -> loosened tolerance
    assert jnp.allclose(out, ref, atol=5e-2, rtol=5e-2), max_err

    print("KERNEL_OK")
</pallas_src>

<mosaic_0001>
module attributes {stable_mosaic.version = 11 : i64} {
  func.func @_matmul_bias_kernel(%arg0: i32, %arg1: i32, %arg2: memref<128x36xbf16, #tpu.memory_space<vmem>>, %arg3: memref<36x8xbf16, #tpu.memory_space<vmem>>, %arg4: memref<1x8xf32, #tpu.memory_space<vmem>>, %arg5: memref<128x8xbf16, #tpu.memory_space<vmem>>) attributes {dimension_semantics = [#tpu.dimension_semantics<parallel>, #tpu.dimension_semantics<parallel>], iteration_bounds = array<i64: 1, 1>, scalar_prefetch = 0 : i64, scratch_operands = 0 : i64, tpu.core_type = #tpu.core_type<tc>, window_params = [{transform_indices = @transform_0, window_bounds = array<i64: 128, 36>}, {transform_indices = @transform_1, window_bounds = array<i64: 36, 8>}, {transform_indices = @transform_2, window_bounds = array<i64: 1, 8>}, {transform_indices = @transform_3, window_bounds = array<i64: 128, 8>}]} {
    %c0 = arith.constant 0 : index
    %c0_0 = arith.constant 0 : index
    %0 = vector.load %arg2[%c0, %c0_0] : memref<128x36xbf16, #tpu.memory_space<vmem>>, vector<128x36xbf16>
    %c0_1 = arith.constant 0 : index
    %c0_2 = arith.constant 0 : index
    %1 = vector.load %arg3[%c0_1, %c0_2] : memref<36x8xbf16, #tpu.memory_space<vmem>>, vector<36x8xbf16>
    %cst = arith.constant dense<0.000000e+00> : vector<128x8xf32>
    %2 = tpu.matmul %0, %1, %cst {dimension_numbers = #tpu.dot_dimension_numbers<[1], [0], [0], [1], [0, 0, 1, 1], [], []>} : vector<128x36xbf16>, vector<36x8xbf16>, vector<128x8xf32> -> vector<128x8xf32>
    %c0_3 = arith.constant 0 : index
    %c0_4 = arith.constant 0 : index
    %3 = vector.load %arg4[%c0_3, %c0_4] : memref<1x8xf32, #tpu.memory_space<vmem>>, vector<1x8xf32>
    %4 = vector.broadcast %3 : vector<1x8xf32> to vector<128x8xf32>
    %5 = arith.addf %2, %4 : vector<128x8xf32>
    %cst_5 = arith.constant 0.000000e+00 : f32
    %6 = vector.broadcast %cst_5 : f32 to vector<128x8xf32>
    %7 = arith.maximumf %5, %6 : vector<128x8xf32>
    %8 = arith.truncf %7 : vector<128x8xf32> to vector<128x8xbf16>
    %c0_6 = arith.constant 0 : index
    %c0_7 = arith.constant 0 : index
    %9 = vector.load %arg5[%c0_6, %c0_7] : memref<128x8xbf16, #tpu.memory_space<vmem>>, vector<128x8xbf16>
    tpu.vector_store %arg5[%c0_6, %c0_7], %8 {strides = array<i32>} : memref<128x8xbf16, #tpu.memory_space<vmem>>, vector<128x8xbf16>,
    return
  }
  func.func @transform_0(%arg0: i32, %arg1: i32) -> (i32, i32) {
    %c0_i32 = arith.constant 0 : i32
    %c0_i32_0 = arith.constant 0 : i32
    return %arg1, %c0_i32 : i32, i32
  }
  func.func @transform_1(%arg0: i32, %arg1: i32) -> (i32, i32) {
    %c0_i32 = arith.constant 0 : i32
    %c0_i32_0 = arith.constant 0 : i32
    return %c0_i32, %arg0 : i32, i32
  }
  func.func @transform_2(%arg0: i32, %arg1: i32) -> (i32, i32) {
    %c0_i32 = arith.constant 0 : i32
    %c0_i32_0 = arith.constant 0 : i32
    return %c0_i32, %arg0 : i32, i32
  }
  func.func @transform_3(%arg0: i32, %arg1: i32) -> (i32, i32) {
    %c0_i32 = arith.constant 0 : i32
    return %arg1, %arg0 : i32, i32
  }
}

</mosaic_0001>

<llo_original>
// kernel: tpu_custom_call.1
$region0: #{tpu_custom_call.1}
  #allocation0 [shape = 'u32[]', space=smem, size = 0x4, offset = 0x4, fixed_abs, tag = 'smem constant byte address 0x4 - core index']
  #allocation1 [shape = 'u32[144,128]{1,0:T(1,128)}', space=vmem, size = 0x12000, scoped, tag = 'internal scratch']
  %s0 = inlined_call_operand.hbm [shape: bf16[128,36], index: 0, kind: input, shape index: {}]
  %s1 = inlined_call_operand.hbm [shape: bf16[36,8], index: 1, kind: input, shape index: {}]
  %s2 = inlined_call_operand.hbm [shape: f32[1,8], index: 2, kind: input, shape index: {}]
  %s3 = inlined_call_operand.hbm [shape: bf16[128,8], index: 3, kind: output, shape index: {}]
  %s4 = sld [smem:[#allocation0]]
  $region34: #{tpu_custom_call.1} parent=0
    _
  %s6 = ssub.s32 1, %s4
  %s7 = scalar_select 0, %s6, %s4
  $region1: #{tpu_custom_call.1} parent=0
    #allocation2 [shape = 'u8[32768]{0}', space=vmem, size = 0x8000, scoped, tag = 'input window, operand 0, single buffered']
    #allocation3 [shape = 's32[1]{0}', space=sflag, size = 0x4, scoped, tag = 'scoped memory for tpu_custom_call.1']
    #allocation4 [shape = 's32[1]{0}', space=sflag, size = 0x4, scoped, tag = 'scoped memory for tpu_custom_call.1']
    #allocation5 [shape = 'u8[10240]{0}', space=vmem, size = 0x2800, scoped, tag = 'input window, operand 1, single buffered']
    #allocation6 [shape = 's32[1]{0}', space=sflag, size = 0x4, scoped, tag = 'scoped memory for tpu_custom_call.1']
    #allocation7 [shape = 'u8[512]{0}', space=vmem, size = 0x400, scoped, tag = 'input window, operand 2, single buffered']
    #allocation8 [shape = 'u8[32768]{0}', space=vmem, size = 0x8000, scoped, tag = 'output window, operand 0, single buffered']
    %8 = vsyncpa [#allocation3], 0
    %9 = vsyncpa [#allocation6], 0
    %10 = vsyncpa [#allocation4], 0
    // Predicated region
    $region2: #{tpu_custom_call.1} parent=1 // pred_check
      _
    $region3: #{tpu_custom_call.1} parent=1 // pred_check_branch
      %12 = sbr.rel (0) target = $region5
    $region4: #{tpu_custom_call.1} parent=1 // pred_region
      %s14 = ssub.s32 1024, 1024
      %15 = vsyncadd [#allocation3], %s14
      %s16 = sshll.u32 [#allocation2], 4
      %s17 = int_to_ptr.vmem [resolvable:$true] %s16
      %22 = dma.hbm_to_vmem [thread:$0]  %s0, 1024, %s17, [#allocation3], 64, 64, 4
    $region5: #{tpu_custom_call.1} parent=1 // pred_fallthru
      _
    // Predicated region
    $region6: #{tpu_custom_call.1} parent=1 // pred_check
      _
    $region7: #{tpu_custom_call.1} parent=1 // pred_check_branch
      %24 = sbr.rel (0) target = $region9
    $region8: #{tpu_custom_call.1} parent=1 // pred_region
      %s26 = ssub.s32 320, 320
      %27 = vsyncadd [#allocation6], %s26
      %s28 = sshll.u32 [#allocation5], 4
      %s29 = int_to_ptr.vmem [resolvable:$true] %s28
      %34 = dma.hbm_to_vmem [thread:$0]  %s1, 320, %s29, [#allocation6], 64, 64, 4
    $region9: #{tpu_custom_call.1} parent=1 // pred_fallthru
      _
    // Predicated region
    $region10: #{tpu_custom_call.1} parent=1 // pred_check
      _
    $region11: #{tpu_custom_call.1} parent=1 // pred_check_branch
      %36 = sbr.rel (0) target = $region13
    $region12: #{tpu_custom_call.1} parent=1 // pred_region
      %s38 = ssub.s32 16, 16
      %39 = vsyncadd [#allocation6], %s38
      %s41 = sshll.u32 [#allocation7], 4
      %s42 = int_to_ptr.vmem [resolvable:$true] %s41
      %44 = dma.hbm_to_vmem [thread:$0]  %s2, 16, %s42, [#allocation6]
    $region13: #{tpu_custom_call.1} parent=1 // pred_fallthru
      _
    // Predicated region
    $region14: #{tpu_custom_call.1} parent=1 // pred_check
      _
    $region15: #{tpu_custom_call.1} parent=1 // pred_check_branch
      %46 = sbr.rel (0) target = $region17
    $region16: #{tpu_custom_call.1} parent=1 // pred_region
      %47 = dma.done [#allocation3], 1024
    $region17: #{tpu_custom_call.1} parent=1 // pred_fallthru
      _
    // Predicated region
    $region18: #{tpu_custom_call.1} parent=1 // pred_check
      _
    $region19: #{tpu_custom_call.1} parent=1 // pred_check_branch
      %49 = sbr.rel (0) target = $region21
    $region20: #{tpu_custom_call.1} parent=1 // pred_region
      %50 = dma.done [#allocation6], 320
    $region21: #{tpu_custom_call.1} parent=1 // pred_fallthru
      _
    // Predicated region
    $region22: #{tpu_custom_call.1} parent=1 // pred_check
      _
    $region23: #{tpu_custom_call.1} parent=1 // pred_check_branch
      %52 = sbr.rel (0) target = $region25
    $region24: #{tpu_custom_call.1} parent=1 // pred_region
      %53 = dma.done [#allocation6], 16
    $region25: #{tpu_custom_call.1} parent=1 // pred_fallthru
      _
    %v55 = vld [vmem:[#allocation2] sm:$0xf]
    %v56 = vld [vmem:[#allocation2 + $0x4] sm:$0xf]
    %v57 = vld [vmem:[#allocation2 + $0x8] sm:$0xf]
    %v58 = vld [vmem:[#allocation2 + $0xc] sm:$0xf]
    %v59 = vld [vmem:[#allocation2 + $0x10] sm:$0xf]
    %v60 = vld [vmem:[#allocation2 + $0x14] sm:$0xf]
    %v61 = vld [vmem:[#allocation2 + $0x18] sm:$0xf]
    %v62 = vld [vmem:[#allocation2 + $0x1c] sm:$0xf]
    %v63 = vld [vmem:[#allocation2 + $0x20] sm:$0xf]
    %v64 = vld [vmem:[#allocation2 + $0x24] sm:$0xf]
    %v65 = vld [vmem:[#allocation2 + $0x28] sm:$0xf]
    %v66 = vld [vmem:[#allocation2 + $0x2c] sm:$0xf]
    %v67 = vld [vmem:[#allocation2 + $0x30] sm:$0xf]
    %v68 = vld [vmem:[#allocation2 + $0x34] sm:$0xf]
    %v69 = vld [vmem:[#allocation2 + $0x38] sm:$0xf]
    %v70 = vld [vmem:[#allocation2 + $0x3c] sm:$0xf]
    %v71 = vld [vmem:[#allocation5] sm:$0xf]
    %v72 = vld [vmem:[#allocation5 + $0x4] sm:$0xf]
    %v73 = vld [vmem:[#allocation5 + $0x8] sm:$0xf]
    %v74 = vld [vmem:[#allocation5 + $0xc] sm:$0xf]
    %v75 = vld [vmem:[#allocation5 + $0x10] sm:$0x3]
    %v76 = vld [vmem:[#allocation7] sm:$0x1]
    %v78 = vlaneseq
    %v79 = vshrl.u32 %v78, 7
    %v80 = vsub.s32 0, %v79
    %v81 = vrot.slane %v76, %v80
    %v99 = vunpack.c.l.b16 %v55
    %v100 = vunpack.c.l.b16 %v56
    %v101 = vunpack.c.l.b16 %v57
    %v102 = vunpack.c.l.b16 %v58
    %v103 = vunpack.c.l.b16 %v59
    %v104 = vunpack.c.l.b16 %v60
    %v105 = vunpack.c.l.b16 %v61
    %v106 = vunpack.c.l.b16 %v62
    %v107 = vunpack.c.l.b16 %v63
    %v108 = vunpack.c.l.b16 %v64
    %v109 = vunpack.c.l.b16 %v65
    %v110 = vunpack.c.l.b16 %v66
    %v111 = vunpack.c.l.b16 %v67
    %v112 = vunpack.c.l.b16 %v68
    %v113 = vunpack.c.l.b16 %v69
    %v114 = vunpack.c.l.b16 %v70
    %v115 = vpack.c.b16 %v100, %v99
    %v116 = vpack.c.b16 %v102, %v101
    %v117 = vpack.c.b16 %v104, %v103
    %v118 = vpack.c.b16 %v106, %v105
    %v119 = vpack.c.b16 %v108, %v107
    %v120 = vpack.c.b16 %v110, %v109
    %v121 = vpack.c.b16 %v112, %v111
    %v122 = vpack.c.b16 %v114, %v113
    %v128 = vunpack.c.l.b16 %v71
    %v129 = vunpack.c.l.b16 %v72
    %v130 = vunpack.c.l.b16 %v73
    %v131 = vunpack.c.l.b16 %v74
    %v132 = vunpack.c.l.b16 %v75
    %v133 = vpack.c.b16 %v129, %v128
    %v134 = vpack.c.b16 %v131, %v130
    %v135 = vpack.c.b16 %v132, %v132
    %vm138 = vcmask 293888
    %v140 = vsel %vm138, %v115, 0
    %v143 = vsel %vm138, %v116, 0
    %v146 = vsel %vm138, %v117, 0
    %v149 = vsel %vm138, %v118, 0
    %v152 = vsel %vm138, %v119, 0
    %v155 = vsel %vm138, %v120, 0
    %v158 = vsel %vm138, %v121, 0
    %v161 = vsel %vm138, %v122, 0
    %vm163 = vcmask 1041408
    %v165 = vsel %vm163, %v135, 0
    %167 = vmatprep.subr.bf16.mxu0 0
    %168 = vmatpush1.bf16.msra.mxu0 %v133
    %169 = vmatprep.subr.bf16.mxu0 0
    %170 = vmatpush1.bf16.msra.mxu0 %v134
    %171 = vmatprep.subr.bf16.mxu0 0
    %172 = vmatpush1.bf16.msra.mxu0 %v165
    %173 = vmatprep.subr.bf16.mxu0 0
    %174 = vmatpush1.bf16.msra.mxu0 0
    %175 = vmatprep.subr.bf16.mxu0 0
    %176 = vmatpush1.bf16.msra.mxu0 0
    %177 = vmatprep.subr.bf16.mxu0 0
    %178 = vmatpush1.bf16.msra.mxu0 0
    %179 = vmatprep.subr.bf16.mxu0 0
    %180 = vmatpush1.bf16.msra.mxu0 0
    %181 = vmatprep.subr.bf16.mxu0 0
    %182 = vmatpush1.bf16.msra.mxu0 0
    %183 = vmatprep.subr.bf16.mxu0 0
    %184 = vmatpush1.bf16.msra.mxu0 0
    %185 = vmatprep.subr.bf16.mxu0 0
    %186 = vmatpush1.bf16.msra.mxu0 0
    %187 = vmatprep.subr.bf16.mxu0 0
    %188 = vmatpush1.bf16.msra.mxu0 0
    %189 = vmatprep.subr.bf16.mxu0 0
    %190 = vmatpush1.bf16.msra.mxu0 0
    %191 = vmatprep.subr.bf16.mxu0 0
    %192 = vmatpush1.bf16.msra.mxu0 0
    %193 = vmatprep.subr.bf16.mxu0 0
    %194 = vmatpush1.bf16.msra.mxu0 0
    %195 = vmatprep.subr.bf16.mxu0 0
    %196 = vmatpush1.bf16.msra.mxu0 0
    %197 = vmatprep.subr.bf16.mxu0 0
    %198 = vmatpush1.bf16.msra.mxu0 0
    %199 = vmatprep.mubr.bf16.mxu0 0
    %200 = vmatmul.mubr.bf16.gmra.mrb[0].mxu0 %v140
    %v201 = vpop.f32.mrb[0].mxu0
    %v202 = vadd.f32 %v81, %v201
    %v203 = vpop.f32.mrb[0].mxu0
    %v204 = vpop.f32.mrb[0].mxu0
    %v205 = vadd.f32 %v81, %v204
    %v206 = vpop.f32.mrb[0].mxu0
    %207 = vmatprep.mubr.bf16.mxu0 0
    %208 = vmatmul.mubr.bf16.gmra.mrb[0].mxu0 %v143
    %v209 = vpop.f32.mrb[0].mxu0
    %v210 = vadd.f32 %v81, %v209
    %v211 = vpop.f32.mrb[0].mxu0
    %v212 = vpop.f32.mrb[0].mxu0
    %v213 = vadd.f32 %v81, %v212
    %v214 = vpop.f32.mrb[0].mxu0
    %215 = vmatprep.mubr.bf16.mxu0 0
    %216 = vmatmul.mubr.bf16.gmra.mrb[0].mxu0 %v146
    %v217 = vpop.f32.mrb[0].mxu0
    %v218 = vadd.f32 %v81, %v217
    %v219 = vpop.f32.mrb[0].mxu0
    %v220 = vpop.f32.mrb[0].mxu0
    %v221 = vadd.f32 %v81, %v220
    %v222 = vpop.f32.mrb[0].mxu0
    %223 = vmatprep.mubr.bf16.mxu0 0
    %224 = vmatmul.mubr.bf16.gmra.mrb[0].mxu0 %v149
    %v225 = vpop.f32.mrb[0].mxu0
    %v226 = vadd.f32 %v81, %v225
    %v227 = vpop.f32.mrb[0].mxu0
    %v228 = vpop.f32.mrb[0].mxu0
    %v229 = vadd.f32 %v81, %v228
    %v230 = vpop.f32.mrb[0].mxu0
    %231 = vmatprep.mubr.bf16.mxu0 0
    %232 = vmatmul.mubr.bf16.gmra.mrb[0].mxu0 %v152
    %v233 = vpop.f32.mrb[0].mxu0
    %v234 = vadd.f32 %v81, %v233
    %v235 = vpop.f32.mrb[0].mxu0
    %v236 = vpop.f32.mrb[0].mxu0
    %v237 = vadd.f32 %v81, %v236
    %v238 = vpop.f32.mrb[0].mxu0
    %239 = vmatprep.mubr.bf16.mxu0 0
    %240 = vmatmul.mubr.bf16.gmra.mrb[0].mxu0 %v155
    %v241 = vpop.f32.mrb[0].mxu0
    %v242 = vadd.f32 %v81, %v241
    %v243 = vpop.f32.mrb[0].mxu0
    %v244 = vpop.f32.mrb[0].mxu0
    %v245 = vadd.f32 %v81, %v244
    %v246 = vpop.f32.mrb[0].mxu0
    %247 = vmatprep.mubr.bf16.mxu0 0
    %248 = vmatmul.mubr.bf16.gmra.mrb[0].mxu0 %v158
    %v249 = vpop.f32.mrb[0].mxu0
    %v250 = vadd.f32 %v81, %v249
    %v251 = vpop.f32.mrb[0].mxu0
    %v252 = vpop.f32.mrb[0].mxu0
    %v253 = vadd.f32 %v81, %v252
    %v254 = vpop.f32.mrb[0].mxu0
    %255 = vmatprep.mubr.bf16.mxu0 0
    %256 = vmatmul.mubr.bf16.gmra.mrb[0].mxu0 %v161
    %v257 = vpop.f32.mrb[0].mxu0
    %v258 = vadd.f32 %v81, %v257
    %v259 = vpop.f32.mrb[0].mxu0
    %v260 = vpop.f32.mrb[0].mxu0
    %v261 = vadd.f32 %v81, %v260
    %v262 = vpop.f32.mrb[0].mxu0
    %263 = vdwg.mxu0
    %v264 = vmax.f32 %v202, 0.0
    %v265 = vmax.f32 %v205, 0.0
    %v266 = vmax.f32 %v210, 0.0
    %v267 = vmax.f32 %v213, 0.0
    %v268 = vmax.f32 %v218, 0.0
    %v269 = vmax.f32 %v221, 0.0
    %v270 = vmax.f32 %v226, 0.0
    %v271 = vmax.f32 %v229, 0.0
    %v272 = vmax.f32 %v234, 0.0
    %v273 = vmax.f32 %v237, 0.0
    %v274 = vmax.f32 %v242, 0.0
    %v275 = vmax.f32 %v245, 0.0
    %v276 = vmax.f32 %v250, 0.0
    %v277 = vmax.f32 %v253, 0.0
    %v278 = vmax.f32 %v258, 0.0
    %v279 = vmax.f32 %v261, 0.0
    %v280 = vpack.c.bf16 %v265, %v264
    %v281 = vpack.c.bf16 %v267, %v266
    %v282 = vpack.c.bf16 %v269, %v268
    %v283 = vpack.c.bf16 %v271, %v270
    %v284 = vpack.c.bf16 %v273, %v272
    %v285 = vpack.c.bf16 %v275, %v274
    %v286 = vpack.c.bf16 %v277, %v276
    %v287 = vpack.c.bf16 %v279, %v278
    %v296 = vunpack.c.l.b16 %v280
    %v297 = vunpack.c.h.b16 %v280
    %v298 = vunpack.c.l.b16 %v281
    %v299 = vunpack.c.h.b16 %v281
    %v300 = vunpack.c.l.b16 %v282
    %v301 = vunpack.c.h.b16 %v282
    %v302 = vunpack.c.l.b16 %v283
    %v303 = vunpack.c.h.b16 %v283
    %v304 = vunpack.c.l.b16 %v284
    %v305 = vunpack.c.h.b16 %v284
    %v306 = vunpack.c.l.b16 %v285
    %v307 = vunpack.c.h.b16 %v285
    %v308 = vunpack.c.l.b16 %v286
    %v309 = vunpack.c.h.b16 %v286
    %v310 = vunpack.c.l.b16 %v287
    %v311 = vunpack.c.h.b16 %v287
    %v312 = vpack.c.b16 %v296, %v296
    %v313 = vpack.c.b16 %v297, %v297
    %v314 = vpack.c.b16 %v298, %v298
    %v315 = vpack.c.b16 %v299, %v299
    %v316 = vpack.c.b16 %v300, %v300
    %v317 = vpack.c.b16 %v301, %v301
    %v318 = vpack.c.b16 %v302, %v302
    %v319 = vpack.c.b16 %v303, %v303
    %v320 = vpack.c.b16 %v304, %v304
    %v321 = vpack.c.b16 %v305, %v305
    %v322 = vpack.c.b16 %v306, %v306
    %v323 = vpack.c.b16 %v307, %v307
    %v324 = vpack.c.b16 %v308, %v308
    %v325 = vpack.c.b16 %v309, %v309
    %v326 = vpack.c.b16 %v310, %v310
    %v327 = vpack.c.b16 %v311, %v311
    %vm344 = vcmask 60416
    %345 = vst.msk [vmem:[#allocation8] sm:$0xf] %vm344, %v312
    %346 = vst.msk [vmem:[#allocation8 + $0x4] sm:$0xf] %vm344, %v313
    %347 = vst.msk [vmem:[#allocation8 + $0x8] sm:$0xf] %vm344, %v314
    %348 = vst.msk [vmem:[#allocation8 + $0xc] sm:$0xf] %vm344, %v315
    %349 = vst.msk [vmem:[#allocation8 + $0x10] sm:$0xf] %vm344, %v316
    %350 = vst.msk [vmem:[#allocation8 + $0x14] sm:$0xf] %vm344, %v317
    %351 = vst.msk [vmem:[#allocation8 + $0x18] sm:$0xf] %vm344, %v318
    %352 = vst.msk [vmem:[#allocation8 + $0x1c] sm:$0xf] %vm344, %v319
    %353 = vst.msk [vmem:[#allocation8 + $0x20] sm:$0xf] %vm344, %v320
    %354 = vst.msk [vmem:[#allocation8 + $0x24] sm:$0xf] %vm344, %v321
    %355 = vst.msk [vmem:[#allocation8 + $0x28] sm:$0xf] %vm344, %v322
    %356 = vst.msk [vmem:[#allocation8 + $0x2c] sm:$0xf] %vm344, %v323
    %357 = vst.msk [vmem:[#allocation8 + $0x30] sm:$0xf] %vm344, %v324
    %358 = vst.msk [vmem:[#allocation8 + $0x34] sm:$0xf] %vm344, %v325
    %359 = vst.msk [vmem:[#allocation8 + $0x38] sm:$0xf] %vm344, %v326
    %360 = vst.msk [vmem:[#allocation8 + $0x3c] sm:$0xf] %vm344, %v327
    // Predicated region
    $region26: #{tpu_custom_call.1} parent=1 // pred_check
      _
    $region27: #{tpu_custom_call.1} parent=1 // pred_check_branch
      %362 = sbr.rel (0) target = $region29
    $region28: #{tpu_custom_call.1} parent=1 // pred_region
      %s364 = ssub.s32 1024, 1024
      %365 = vsyncadd [#allocation4], %s364
      %s366 = sshll.u32 [#allocation8], 4
      %s367 = int_to_ptr.vmem [resolvable:$true] %s366
      %372 = dma.vmem_to_hbm [thread:$0]  %s367, 1024, %s3, [#allocation4], 64, 64, 4
    $region29: #{tpu_custom_call.1} parent=1 // pred_fallthru
      _
    // Predicated region
    $region30: #{tpu_custom_call.1} parent=1 // pred_check
      _
    $region31: #{tpu_custom_call.1} parent=1 // pred_check_branch
      %374 = sbr.rel (0) target = $region33
    $region32: #{tpu_custom_call.1} parent=1 // pred_region
      %375 = dma.done [#allocation4], 1024
    $region33: #{tpu_custom_call.1} parent=1 // pred_fallthru
      _
    %376 = vsyncpa [#allocation3], 1
    %377 = vsyncpa [#allocation6], 1
    %378 = vsyncpa [#allocation4], 1

</llo_original>
